<compile_context>
chip_gen: v7x
topology: tpu7x:2x2x1
jax: 0.10.0
libtpu: 0.0.40
codegen_flags: <defaults>
</compile_context>

<pallas_src>
import functools
import numpy as np
import jax
import jax.numpy as jnp
from jax.experimental import pallas as pl
from jax.experimental.pallas import tpu as pltpu

_VMEM = pl.BlockSpec(memory_space=pltpu.MemorySpace.VMEM)
_VMEM_LIMIT = 48 * 1024 * 1024     # <= 64 MiB physical on v7x, headroom on v5e/v6e

# Preferred tiles: bf16 A_hat/um tile = 256*2048*2 B = 1 MiB per buffer (x2 for
# double-buffering) -- comfortably inside every generation's VMEM budget.
_TILE_ROWS = 256                   # sublane axis, multiple of 8
_TILE_K = 2048                     # lane axis of A_hat / um tiles, multiple of 128


def _pick_tile(dim, pref):
    """`pref` if it divides dim, else the full dim (demo sizes are small; production
    sizes should be padded to multiples of the preferred tile)."""
    if dim <= pref or dim % pref != 0:
        return dim
    return pref


# ----------------------------- Pallas kernels ------------------------------

def _encode_hw_kernel(f_ref, we_ref, be_ref, wpq_ref, o_ref):
    # h = features @ W_enc + b_enc ; hW = h @ [W_p | W_q]
    # Computed once per movie row (hoisted out of the tiled A_hat loop).
    h = jnp.dot(f_ref[...], we_ref[...],
                preferred_element_type=jnp.float32) + be_ref[...]
    hw = jnp.dot(h, wpq_ref[...], preferred_element_type=jnp.float32)
    o_ref[...] = hw.astype(o_ref.dtype)      # bf16 out halves gconv HBM traffic


def _gconv_pq_kernel(a_ref, hw_ref, b_ref, pq_ref, ss_ref, acc_ref):
    # Fused gconv_p / gconv_q:  PQ_tile = sum_k A_hat[i,k] @ hW[k] + [b_p | b_q]
    # plus a running sum(PQ*PQ) for the beta regularizer (epilogue fold).
    i = pl.program_id(0)
    k = pl.program_id(1)

    @pl.when(jnp.logical_and(i == 0, k == 0))
    def _init_reg():
        ss_ref[...] = jnp.zeros_like(ss_ref)

    @pl.when(k == 0)
    def _init_acc():
        acc_ref[...] = jnp.zeros_like(acc_ref)

    acc_ref[...] += jnp.dot(a_ref[...], hw_ref[...],
                            preferred_element_type=jnp.float32)

    @pl.when(k == pl.num_programs(1) - 1)
    def _finalize():
        pq = acc_ref[...] + b_ref[...]
        pq_ref[...] = pq
        ss_ref[...] += jnp.reshape(jnp.sum(pq * pq), (1, 1))


def _spmm_norm_kernel(um_ref, p_ref, invdeg_ref, o_ref, acc_ref):
    # user_emb = (um @ P) * (1/deg)   == torch.sparse.mm + per-user normalization
    k = pl.program_id(1)

    @pl.when(k == 0)
    def _init():
        acc_ref[...] = jnp.zeros_like(acc_ref)

    acc_ref[...] += jnp.dot(um_ref[...], p_ref[...],
                            preferred_element_type=jnp.float32)

    @pl.when(k == pl.num_programs(1) - 1)
    def _finalize():
        o_ref[...] = acc_ref[...] * invdeg_ref[...]


def _rating_loss_kernel(ue_ref, qp_ref, qn_ref, bu_ref, bip_ref, bin_ref,
                        reg_ref, buall_ref, biall_ref, o_ref, *, beta, gamma):
    # Fused positive + negative rating estimation and FISM loss.
    # ue_ref already holds user_emb[user_idx] / deg[user_idx]  (normalized in spmm).
    ue = ue_ref[...]                                              # (B, H)
    s_pos = jnp.sum(ue * qp_ref[...], axis=-1, keepdims=True)     # (B, 1)
    s_neg = jnp.sum(ue[:, None, :] * qn_ref[...], axis=-1)        # (B, S)
    r_ui = bu_ref[...] + bip_ref[...] + s_pos                     # (B, 1)
    neg_r = bu_ref[...] + bin_ref[...] + s_neg                    # (B, S)
    diff = 1.0 - (r_ui - neg_r)
    pair = 0.5 * jnp.sum(diff * diff)
    bias_reg = 0.5 * gamma * (jnp.sum(buall_ref[...] * buall_ref[...]) +
                              jnp.sum(biall_ref[...] * biall_ref[...]))
    total = pair + bias_reg + 0.5 * beta * jnp.sum(reg_ref[...])
    o_ref[...] = jnp.reshape(total, (1, 1))


# -------------------------- pallas_call wrappers ---------------------------

def encode_hw(features, w_enc, b_enc, w_pq):
    m, f = features.shape
    hid = w_enc.shape[1]
    h2 = w_pq.shape[1]
    tm = _pick_tile(m, _TILE_ROWS)
    return pl.pallas_call(
        _encode_hw_kernel,
        out_shape=jax.ShapeDtypeStruct((m, h2), jnp.bfloat16),
        grid_spec=pltpu.PrefetchScalarGridSpec(
            num_scalar_prefetch=0,
            grid=(m // tm,),
            in_specs=[
                pl.BlockSpec((tm, f), lambda i: (i, 0)),
                pl.BlockSpec((f, hid), lambda i: (0, 0)),
                pl.BlockSpec((1, hid), lambda i: (0, 0)),
                pl.BlockSpec((hid, h2), lambda i: (0, 0)),
            ],
            out_specs=pl.BlockSpec((tm, h2), lambda i: (i, 0)),
        ),
        compiler_params=pltpu.CompilerParams(
            dimension_semantics=("parallel",),
            vmem_limit_bytes=_VMEM_LIMIT),
    )(features, w_enc, b_enc.reshape(1, -1), w_pq)


def gconv_pq(a_hat_bf16, hw_bf16, b_pq):
    m, k_dim = a_hat_bf16.shape
    h2 = hw_bf16.shape[1]
    tm = _pick_tile(m, _TILE_ROWS)
    tk = _pick_tile(k_dim, _TILE_K)
    pq, reg = pl.pallas_call(
        _gconv_pq_kernel,
        out_shape=(jax.ShapeDtypeStruct((m, h2), jnp.float32),
                   jax.ShapeDtypeStruct((1, 1), jnp.float32)),
        grid_spec=pltpu.PrefetchScalarGridSpec(
            num_scalar_prefetch=0,
            grid=(m // tm, k_dim // tk),
            in_specs=[
                pl.BlockSpec((tm, tk), lambda i, k: (i, k)),
                pl.BlockSpec((tk, h2), lambda i, k: (k, 0)),
                pl.BlockSpec((1, h2), lambda i, k: (0, 0)),
            ],
            out_specs=(
                pl.BlockSpec((tm, h2), lambda i, k: (i, 0)),
                pl.BlockSpec((1, 1), lambda i, k: (0, 0)),
            ),
            scratch_shapes=[pltpu.VMEM((tm, h2), jnp.float32)],
        ),
        # Both axes 'arbitrary': the (1,1) regularizer accumulator is written across
        # row tiles, so the row axis must not be sharded across TensorCores.
        compiler_params=pltpu.CompilerParams(
            dimension_semantics=("arbitrary", "arbitrary"),
            vmem_limit_bytes=_VMEM_LIMIT),
    )(a_hat_bf16, hw_bf16, b_pq.reshape(1, -1))
    return pq, reg


def spmm_norm(um_bf16, p_bf16, inv_deg):
    u, k_dim = um_bf16.shape
    hid = p_bf16.shape[1]
    tu = _pick_tile(u, _TILE_ROWS)
    tk = _pick_tile(k_dim, _TILE_K)
    return pl.pallas_call(
        _spmm_norm_kernel,
        out_shape=jax.ShapeDtypeStruct((u, hid), jnp.float32),
        grid_spec=pltpu.PrefetchScalarGridSpec(
            num_scalar_prefetch=0,
            grid=(u // tu, k_dim // tk),
            in_specs=[
                pl.BlockSpec((tu, tk), lambda i, k: (i, k)),
                pl.BlockSpec((tk, hid), lambda i, k: (k, 0)),
                pl.BlockSpec((tu, 1), lambda i, k: (i, 0)),
            ],
            out_specs=pl.BlockSpec((tu, hid), lambda i, k: (i, 0)),
            scratch_shapes=[pltpu.VMEM((tu, hid), jnp.float32)],
        ),
        compiler_params=pltpu.CompilerParams(
            dimension_semantics=("parallel", "arbitrary"),
            vmem_limit_bytes=_VMEM_LIMIT),
    )(um_bf16, p_bf16, inv_deg)


def rating_loss(ue_g, qp_g, qn_g, bu_g, bip_g, bin_g, reg_pq, b_u, b_i,
                beta, gamma):
    # TODO(synk): for production-scale sampled batches, tile this kernel over the
    #             batch axis with a (1,1) loss accumulator (demo batch is tiny).
    kern = functools.partial(_rating_loss_kernel, beta=beta, gamma=gamma)
    out = pl.pallas_call(
        kern,
        out_shape=jax.ShapeDtypeStruct((1, 1), jnp.float32),
        in_specs=[_VMEM] * 9,
        out_specs=_VMEM,
    )(ue_g, qp_g, qn_g, bu_g, bip_g, bin_g, reg_pq,
      b_u.reshape(1, -1), b_i.reshape(1, -1))
    return out[0, 0]


# -------------------------------- FISM model --------------------------------

class FISMPallas:
    def __init__(self, user_movie_dense, users, movies,
                 in_feats, num_hidden, beta, gamma, key):
        self.num_users, self.num_movies = user_movie_dense.shape
        self.num_hidden = int(num_hidden)
        um_np = np.asarray(user_movie_dense, np.float32)
        # TODO(synk): production path is a CSR / scalar-prefetch sparse SpMM; the
        #             densified rating matrix is kept here (tiled + bf16 inputs).
        self.um = jnp.asarray(um_np, jnp.bfloat16)
        self.users = jnp.asarray(users, jnp.int32)
        self.movies = jnp.asarray(movies, jnp.int32)
        # user_deg = user_movie_spm.dot(ones)  (sum of rating values per user),
        # precomputed as a zero-guarded reciprocal and folded into the spmm epilogue.
        deg = um_np.sum(axis=1)
        inv = np.where(deg > 0, 1.0 / np.maximum(deg, 1e-12), 0.0)
        self.inv_deg = jnp.asarray(inv.reshape(-1, 1), jnp.float32)
        self.beta, self.gamma = float(beta), float(gamma)

        k = jax.random.split(key, 4)
        s_enc = 1.0 / np.sqrt(in_feats)
        s_h = 1.0 / np.sqrt(num_hidden)
        self.w_enc = jax.random.uniform(k[0], (in_feats, num_hidden),
                                        jnp.float32, -s_enc, s_enc)
        self.b_enc = jax.random.uniform(k[1], (num_hidden,),
                                        jnp.float32, -s_enc, s_enc)
        w_p = jax.random.uniform(k[2], (num_hidden, num_hidden),
                                 jnp.float32, -s_h, s_h)
        w_q = jax.random.uniform(k[3], (num_hidden, num_hidden),
                                 jnp.float32, -s_h, s_h)
        # gconv_p / gconv_q fused: lane-concatenated weights & biases so A_hat is
        # streamed once and the MXU N-dim doubles.
        self.w_pq = jnp.concatenate([w_p, w_q], axis=1)
        self.b_pq = jnp.zeros((2 * num_hidden,), jnp.float32)
        self.b_u = jnp.zeros((self.num_users,), jnp.float32)     # nn.Parameter(zeros)
        self.b_i = jnp.zeros((self.num_movies,), jnp.float32)    # nn.Parameter(zeros)

        # TODO(synk): gconv_p / gconv_q are external DGL modules in the original
        #             code; modelled as one dense GCN layer over a deterministic
        #             symmetric-normalized movie-movie co-rating adjacency.
        co = (um_np.T @ um_np > 0).astype(np.float32)
        np.fill_diagonal(co, 1.0)
        dinv = 1.0 / np.sqrt(co.sum(axis=1))
        self.a_hat = jnp.asarray(co * dinv[:, None] * dinv[None, :],
                                 jnp.bfloat16)

    def forward(self, features, neg_sample_size, sample_key):
        hid = self.num_hidden
        hw = encode_hw(features, self.w_enc, self.b_enc, self.w_pq)   # (M, 2H) bf16
        pq, reg_pq = gconv_pq(self.a_hat, hw, self.b_pq)              # (M, 2H) f32
        P = pq[:, :hid]
        Q = pq[:, hid:]
        user_emb = spmm_norm(self.um, P.astype(jnp.bfloat16),
                             self.inv_deg)                            # (U, H) normalized

        tot = int(self.users.shape[0])
        n_pos = tot // 10
        k1, k2 = jax.random.split(sample_key)
        pos_idx = jax.random.randint(k1, (n_pos,), 0, tot)
        user_idx = jnp.take(self.users, pos_idx)
        item_idx = jnp.take(self.movies, pos_idx)
        neg_item_idx = jax.random.randint(k2, (n_pos * neg_sample_size,),
                                          0, self.num_movies)

        # gather glue (each sampled user row gathered once; pos + neg scored in the
        # same kernel so the user embedding is loaded a single time)
        ue_g = jnp.take(user_emb, user_idx, axis=0)                     # (B, H)
        qp_g = jnp.take(Q, item_idx, axis=0)                            # (B, H)
        qn_g = jnp.take(Q, neg_item_idx, axis=0).reshape(
            n_pos, neg_sample_size, hid)                                # (B, S, H)
        bu_g = jnp.take(self.b_u, user_idx)[:, None]                    # (B, 1)
        bip_g = jnp.take(self.b_i, item_idx)[:, None]                   # (B, 1)
        bin_g = jnp.take(self.b_i, neg_item_idx).reshape(
            n_pos, neg_sample_size)                                     # (B, S)

        return rating_loss(ue_g, qp_g, qn_g, bu_g, bip_g, bin_g, reg_pq,
                           self.b_u, self.b_i, self.beta, self.gamma)


# ---------------------------------- main ------------------------------------

if __name__ == "__main__":
    num_users, num_movies = 8, 16
    in_feats, num_hidden = 8, 32
    beta, gamma = 0.01, 0.01
    neg_sample_size = 2

    # deterministic COO rating matrix: each user rates 5 distinct movies
    users_np, movies_np, vals_np = [], [], []
    for u in range(num_users):
        for kk in range(5):
            m = (u * 3 + kk * 2) % num_movies
            users_np.append(u)
            movies_np.append(m)
            vals_np.append(1.0 + float((u + kk) % 5))
    um = np.zeros((num_users, num_movies), np.float32)
    um[users_np, movies_np] = vals_np

    key = jax.random.PRNGKey(0)
    kparam, kfeat, ksample = jax.random.split(key, 3)
    features = jax.random.normal(kfeat, (num_movies, in_feats), jnp.float32)

    model = FISMPallas(um, users_np, movies_np,
                       in_feats, num_hidden, beta, gamma, kparam)
    loss = model.forward(features, neg_sample_size, ksample)
    loss = jax.block_until_ready(loss)
    assert np.isfinite(float(loss)), "loss is not finite"
    print("KERNEL_OK")
</pallas_src>

<mosaic_0001>
module attributes {stable_mosaic.version = 11 : i64} {
  func.func @_encode_hw_kernel(%arg0: i32, %arg1: memref<16x8xf32, #tpu.memory_space<vmem>>, %arg2: memref<8x32xf32, #tpu.memory_space<vmem>>, %arg3: memref<1x32xf32, #tpu.memory_space<vmem>>, %arg4: memref<32x64xf32, #tpu.memory_space<vmem>>, %arg5: memref<16x64xbf16, #tpu.memory_space<vmem>>) attributes {dimension_semantics = [#tpu.dimension_semantics<parallel>], iteration_bounds = array<i64: 1>, scalar_prefetch = 0 : i64, scratch_operands = 0 : i64, tpu.core_type = #tpu.core_type<tc>, window_params = [{transform_indices = @transform_0, window_bounds = array<i64: 16, 8>}, {pipeline_mode = #tpu.pipeline_mode<synchronous>, transform_indices = @transform_1, window_bounds = array<i64: 8, 32>}, {pipeline_mode = #tpu.pipeline_mode<synchronous>, transform_indices = @transform_2, window_bounds = array<i64: 1, 32>}, {pipeline_mode = #tpu.pipeline_mode<synchronous>, transform_indices = @transform_3, window_bounds = array<i64: 32, 64>}, {transform_indices = @transform_4, window_bounds = array<i64: 16, 64>}]} {
    %c0 = arith.constant 0 : index
    %c0_0 = arith.constant 0 : index
    %0 = vector.load %arg1[%c0, %c0_0] : memref<16x8xf32, #tpu.memory_space<vmem>>, vector<16x8xf32>
    %c0_1 = arith.constant 0 : index
    %c0_2 = arith.constant 0 : index
    %1 = vector.load %arg2[%c0_1, %c0_2] : memref<8x32xf32, #tpu.memory_space<vmem>>, vector<8x32xf32>
    %cst = arith.constant dense<0.000000e+00> : vector<16x32xf32>
    %2 = tpu.matmul %0, %1, %cst {dimension_numbers = #tpu.dot_dimension_numbers<[1], [0], [0], [1], [0, 0, 1, 1], [], []>} : vector<16x8xf32>, vector<8x32xf32>, vector<16x32xf32> -> vector<16x32xf32>
    %c0_3 = arith.constant 0 : index
    %c0_4 = arith.constant 0 : index
    %3 = vector.load %arg3[%c0_3, %c0_4] : memref<1x32xf32, #tpu.memory_space<vmem>>, vector<1x32xf32>
    %4 = vector.broadcast %3 : vector<1x32xf32> to vector<16x32xf32>
    %5 = arith.addf %2, %4 : vector<16x32xf32>
    %c0_5 = arith.constant 0 : index
    %c0_6 = arith.constant 0 : index
    %6 = vector.load %arg4[%c0_5, %c0_6] : memref<32x64xf32, #tpu.memory_space<vmem>>, vector<32x64xf32>
    %cst_7 = arith.constant dense<0.000000e+00> : vector<16x64xf32>
    %7 = tpu.matmul %5, %6, %cst_7 {dimension_numbers = #tpu.dot_dimension_numbers<[1], [0], [0], [1], [0, 0, 1, 1], [], []>} : vector<16x32xf32>, vector<32x64xf32>, vector<16x64xf32> -> vector<16x64xf32>
    %8 = arith.truncf %7 : vector<16x64xf32> to vector<16x64xbf16>
    %c0_8 = arith.constant 0 : index
    %c0_9 = arith.constant 0 : index
    %9 = vector.load %arg5[%c0_8, %c0_9] : memref<16x64xbf16, #tpu.memory_space<vmem>>, vector<16x64xbf16>
    tpu.vector_store %arg5[%c0_8, %c0_9], %8 {strides = array<i32>} : memref<16x64xbf16, #tpu.memory_space<vmem>>, vector<16x64xbf16>,
    return
  }
  func.func @transform_0(%arg0: i32) -> (i32, i32) {
    %c0_i32 = arith.constant 0 : i32
    %c0_i32_0 = arith.constant 0 : i32
    return %arg0, %c0_i32 : i32, i32
  }
  func.func @transform_1(%arg0: i32) -> (i32, i32) {
    %c0_i32 = arith.constant 0 : i32
    %c0_i32_0 = arith.constant 0 : i32
    %c0_i32_1 = arith.constant 0 : i32
    return %c0_i32, %c0_i32_0 : i32, i32
  }
  func.func @transform_2(%arg0: i32) -> (i32, i32) {
    %c0_i32 = arith.constant 0 : i32
    %c0_i32_0 = arith.constant 0 : i32
    %c0_i32_1 = arith.constant 0 : i32
    return %c0_i32, %c0_i32_0 : i32, i32
  }
  func.func @transform_3(%arg0: i32) -> (i32, i32) {
    %c0_i32 = arith.constant 0 : i32
    %c0_i32_0 = arith.constant 0 : i32
    %c0_i32_1 = arith.constant 0 : i32
    return %c0_i32, %c0_i32_0 : i32, i32
  }
  func.func @transform_4(%arg0: i32) -> (i32, i32) {
    %c0_i32 = arith.constant 0 : i32
    %c0_i32_0 = arith.constant 0 : i32
    return %arg0, %c0_i32 : i32, i32
  }
}

</mosaic_0001>

<llo_original>
// kernel: tpu_custom_call.1
$region0: #{tpu_custom_call.1}
  #allocation0 [shape = 'u32[]', space=smem, size = 0x4, offset = 0x4, fixed_abs, tag = 'smem constant byte address 0x4 - core index']
  #allocation1 [shape = 'u32[144,128]{1,0:T(1,128)}', space=vmem, size = 0x12000, scoped, tag = 'internal scratch']
  %s0 = inlined_call_operand.vmem [shape: f32[16,8], index: 0, kind: input, shape index: {}]
  %s1 = inlined_call_operand.hbm [shape: f32[8,32], index: 1, kind: input, shape index: {}]
  %s2 = inlined_call_operand.vmem [shape: f32[1,32], index: 2, kind: input, shape index: {}]
  %s3 = inlined_call_operand.vmem [shape: f32[32,64], index: 3, kind: input, shape index: {}]
  %s4 = inlined_call_operand.hbm [shape: bf16[16,64], index: 4, kind: output, shape index: {}]
  %s5 = sld [smem:[#allocation0]]
  $region30: #{tpu_custom_call.1} parent=0
    _
  %s7 = ssub.s32 1, %s5
  %s8 = scalar_select 0, %s7, %s5
  $region1: #{tpu_custom_call.1} parent=0
    #allocation2 [shape = 'u8[4096]{0}', space=vmem, size = 0x1000, scoped, tag = 'input window, operand 1, single buffered']
    #allocation3 [shape = 's32[1]{0}', space=sflag, size = 0x4, scoped, tag = 'scoped memory for tpu_custom_call.1']
    #allocation4 [shape = 's32[1]{0}', space=sflag, size = 0x4, scoped, tag = 'scoped memory for tpu_custom_call.1']
    #allocation5 [shape = 'u8[4096]{0}', space=vmem, size = 0x1000, scoped, tag = 'output window, operand 0, single buffered']
    %9 = vsyncpa [#allocation3], 0
    %10 = vsyncpa [#allocation4], 0
    // Predicated region
    $region2: #{tpu_custom_call.1} parent=1 // pred_check
      _
    $region3: #{tpu_custom_call.1} parent=1 // pred_check_branch
      %12 = sbr.rel (0) target = $region5
    $region4: #{tpu_custom_call.1} parent=1 // pred_region
      _
    $region5: #{tpu_custom_call.1} parent=1 // pred_fallthru
      _
    // Predicated region
    $region6: #{tpu_custom_call.1} parent=1 // pred_check
      _
    $region7: #{tpu_custom_call.1} parent=1 // pred_check_branch
      %14 = sbr.rel (0) target = $region9
    $region8: #{tpu_custom_call.1} parent=1 // pred_region
      %s16 = ssub.s32 128, 128
      %17 = vsyncadd [#allocation3], %s16
      %s19 = sshll.u32 [#allocation2], 4
      %s20 = int_to_ptr.vmem [resolvable:$true] %s19
      %22 = dma.hbm_to_vmem [thread:$0]  %s1, 128, %s20, [#allocation3]
    $region9: #{tpu_custom_call.1} parent=1 // pred_fallthru
      _
    // Predicated region
    $region10: #{tpu_custom_call.1} parent=1 // pred_check
      _
    $region11: #{tpu_custom_call.1} parent=1 // pred_check_branch
      %24 = sbr.rel (0) target = $region13
    $region12: #{tpu_custom_call.1} parent=1 // pred_region
      _
    $region13: #{tpu_custom_call.1} parent=1 // pred_fallthru
      _
    // Predicated region
    $region14: #{tpu_custom_call.1} parent=1 // pred_check
      _
    $region15: #{tpu_custom_call.1} parent=1 // pred_check_branch
      %26 = sbr.rel (0) target = $region17
    $region16: #{tpu_custom_call.1} parent=1 // pred_region
      _
    $region17: #{tpu_custom_call.1} parent=1 // pred_fallthru
      _
    // Predicated region
    $region18: #{tpu_custom_call.1} parent=1 // pred_check
      _
    $region19: #{tpu_custom_call.1} parent=1 // pred_check_branch
      %28 = sbr.rel (0) target = $region21
    $region20: #{tpu_custom_call.1} parent=1 // pred_region
      %29 = dma.done [#allocation3], 128
    $region21: #{tpu_custom_call.1} parent=1 // pred_fallthru
      _
    %v30 = vld [vmem:[%s0] sm:$0xff]
    %v31 = vld [vmem:[%s0 + $0x8] sm:$0xff]
    %v32 = vld [vmem:[#allocation2] sm:$0xff]
    %v33 = vld [vmem:[%s2] sm:$0x1]
    %v35 = vlaneseq
    %v36 = vshrl.u32 %v35, 7
    %v37 = vsub.s32 0, %v36
    %v38 = vrot.slane %v33, %v37
    %vm40 = vcmask 64512
    %v42 = vsel %vm40, %v30, 0
    %v45 = vsel %vm40, %v31, 0
    %47 = vmatprep.subr.mxu0 0.0
    %48 = vmatpush1.msra.mxu0 %v32
    %49 = vmatprep.subr.mxu0 0.0
    %50 = vmatpush1.msra.mxu0 0.0
    %51 = vmatprep.subr.mxu0 0.0
    %52 = vmatpush1.msra.mxu0 0.0
    %53 = vmatprep.subr.mxu0 0.0
    %54 = vmatpush1.msra.mxu0 0.0
    %55 = vmatprep.subr.mxu0 0.0
    %56 = vmatpush1.msra.mxu0 0.0
    %57 = vmatprep.subr.mxu0 0.0
    %58 = vmatpush1.msra.mxu0 0.0
    %59 = vmatprep.subr.mxu0 0.0
    %60 = vmatpush1.msra.mxu0 0.0
    %61 = vmatprep.subr.mxu0 0.0
    %62 = vmatpush1.msra.mxu0 0.0
    %63 = vmatprep.subr.mxu0 0.0
    %64 = vmatpush1.msra.mxu0 0.0
    %65 = vmatprep.subr.mxu0 0.0
    %66 = vmatpush1.msra.mxu0 0.0
    %67 = vmatprep.subr.mxu0 0.0
    %68 = vmatpush1.msra.mxu0 0.0
    %69 = vmatprep.subr.mxu0 0.0
    %70 = vmatpush1.msra.mxu0 0.0
    %71 = vmatprep.subr.mxu0 0.0
    %72 = vmatpush1.msra.mxu0 0.0
    %73 = vmatprep.subr.mxu0 0.0
    %74 = vmatpush1.msra.mxu0 0.0
    %75 = vmatprep.subr.mxu0 0.0
    %76 = vmatpush1.msra.mxu0 0.0
    %77 = vmatprep.subr.mxu0 0.0
    %78 = vmatpush1.msra.mxu0 0.0
    %79 = vmatprep.subr.mxu0 0.0
    %80 = vmatpush1.msra.mxu0 0.0
    %81 = vmatprep.subr.mxu0 0.0
    %82 = vmatpush1.msra.mxu0 0.0
    %83 = vmatprep.subr.mxu0 0.0
    %84 = vmatpush1.msra.mxu0 0.0
    %85 = vmatprep.subr.mxu0 0.0
    %86 = vmatpush1.msra.mxu0 0.0
    %87 = vmatprep.subr.mxu0 0.0
    %88 = vmatpush1.msra.mxu0 0.0
    %89 = vmatprep.subr.mxu0 0.0
    %90 = vmatpush1.msra.mxu0 0.0
    %91 = vmatprep.subr.mxu0 0.0
    %92 = vmatpush1.msra.mxu0 0.0
    %93 = vmatprep.subr.mxu0 0.0
    %94 = vmatpush1.msra.mxu0 0.0
    %95 = vmatprep.subr.mxu0 0.0
    %96 = vmatpush1.msra.mxu0 0.0
    %97 = vmatprep.subr.mxu0 0.0
    %98 = vmatpush1.msra.mxu0 0.0
    %99 = vmatprep.subr.mxu0 0.0
    %100 = vmatpush1.msra.mxu0 0.0
    %101 = vmatprep.subr.mxu0 0.0
    %102 = vmatpush1.msra.mxu0 0.0
    %103 = vmatprep.subr.mxu0 0.0
    %104 = vmatpush1.msra.mxu0 0.0
    %105 = vmatprep.subr.mxu0 0.0
    %106 = vmatpush1.msra.mxu0 0.0
    %107 = vmatprep.subr.mxu0 0.0
    %108 = vmatpush1.msra.mxu0 0.0
    %109 = vmatprep.subr.mxu0 0.0
    %110 = vmatpush1.msra.mxu0 0.0
    %111 = vmatprep.mubr.f32.mxu0 0.0
    %112 = vmatmul.mubr.f32.gmra.mrb[0].mxu0 %v42
    %v113 = vpop.f32.mrb[0].mxu0
    %v114 = vadd.f32 %v38, %v113
    %v115 = vpop.f32.mrb[0].mxu0
    %116 = vmatprep.mubr.f32.mxu0 0.0
    %117 = vmatmul.mubr.f32.gmra.mrb[0].mxu0 %v45
    %v118 = vpop.f32.mrb[0].mxu0
    %v119 = vadd.f32 %v38, %v118
    %v120 = vpop.f32.mrb[0].mxu0
    %121 = vdwg.mxu0
    %v122 = vld [vmem:[%s3] sm:$0xff]
    %v123 = vld [vmem:[%s3 + $0x8] sm:$0xff]
    %v124 = vld [vmem:[%s3 + $0x10] sm:$0xff]
    %v125 = vld [vmem:[%s3 + $0x18] sm:$0xff]
    %vm126 = vcmask 261120
    %v128 = vsel %vm126, %v114, 0
    %v131 = vsel %vm126, %v119, 0
    %133 = vmatprep.subr.mxu0 0.0
    %134 = vmatpush1.msra.mxu0 %v122
    %135 = vmatprep.subr.mxu0 0.0
    %136 = vmatpush1.msra.mxu0 %v123
    %137 = vmatprep.subr.mxu0 0.0
    %138 = vmatpush1.msra.mxu0 %v124
    %139 = vmatprep.subr.mxu0 0.0
    %140 = vmatpush1.msra.mxu0 %v125
    %141 = vmatprep.subr.mxu0 0.0
    %142 = vmatpush1.msra.mxu0 0.0
    %143 = vmatprep.subr.mxu0 0.0
    %144 = vmatpush1.msra.mxu0 0.0
    %145 = vmatprep.subr.mxu0 0.0
    %146 = vmatpush1.msra.mxu0 0.0
    %147 = vmatprep.subr.mxu0 0.0
    %148 = vmatpush1.msra.mxu0 0.0
    %149 = vmatprep.subr.mxu0 0.0
    %150 = vmatpush1.msra.mxu0 0.0
    %151 = vmatprep.subr.mxu0 0.0
    %152 = vmatpush1.msra.mxu0 0.0
    %153 = vmatprep.subr.mxu0 0.0
    %154 = vmatpush1.msra.mxu0 0.0
    %155 = vmatprep.subr.mxu0 0.0
    %156 = vmatpush1.msra.mxu0 0.0
    %157 = vmatprep.subr.mxu0 0.0
    %158 = vmatpush1.msra.mxu0 0.0
    %159 = vmatprep.subr.mxu0 0.0
    %160 = vmatpush1.msra.mxu0 0.0
    %161 = vmatprep.subr.mxu0 0.0
    %162 = vmatpush1.msra.mxu0 0.0
    %163 = vmatprep.subr.mxu0 0.0
    %164 = vmatpush1.msra.mxu0 0.0
    %165 = vmatprep.subr.mxu0 0.0
    %166 = vmatpush1.msra.mxu0 0.0
    %167 = vmatprep.subr.mxu0 0.0
    %168 = vmatpush1.msra.mxu0 0.0
    %169 = vmatprep.subr.mxu0 0.0
    %170 = vmatpush1.msra.mxu0 0.0
    %171 = vmatprep.subr.mxu0 0.0
    %172 = vmatpush1.msra.mxu0 0.0
    %173 = vmatprep.subr.mxu0 0.0
    %174 = vmatpush1.msra.mxu0 0.0
    %175 = vmatprep.subr.mxu0 0.0
    %176 = vmatpush1.msra.mxu0 0.0
    %177 = vmatprep.subr.mxu0 0.0
    %178 = vmatpush1.msra.mxu0 0.0
    %179 = vmatprep.subr.mxu0 0.0
    %180 = vmatpush1.msra.mxu0 0.0
    %181 = vmatprep.subr.mxu0 0.0
    %182 = vmatpush1.msra.mxu0 0.0
    %183 = vmatprep.subr.mxu0 0.0
    %184 = vmatpush1.msra.mxu0 0.0
    %185 = vmatprep.subr.mxu0 0.0
    %186 = vmatpush1.msra.mxu0 0.0
    %187 = vmatprep.subr.mxu0 0.0
    %188 = vmatpush1.msra.mxu0 0.0
    %189 = vmatprep.subr.mxu0 0.0
    %190 = vmatpush1.msra.mxu0 0.0
    %191 = vmatprep.subr.mxu0 0.0
    %192 = vmatpush1.msra.mxu0 0.0
    %193 = vmatprep.subr.mxu0 0.0
    %194 = vmatpush1.msra.mxu0 0.0
    %195 = vmatprep.subr.mxu0 0.0
    %196 = vmatpush1.msra.mxu0 0.0
    %197 = vmatprep.mubr.f32.mxu0 0.0
    %198 = vmatmul.mubr.f32.gmra.mrb[0].mxu0 %v128
    %v199 = vpop.f32.mrb[0].mxu0
    %v200 = vadd.f32 0.0, %v199
    %v201 = vpop.f32.mrb[0].mxu0
    %202 = vmatprep.mubr.f32.mxu0 0.0
    %203 = vmatmul.mubr.f32.gmra.mrb[0].mxu0 %v131
    %v204 = vpop.f32.mrb[0].mxu0
    %v205 = vadd.f32 0.0, %v204
    %v206 = vpop.f32.mrb[0].mxu0
    %207 = vdwg.mxu0
    %v208 = vpack.c.bf16 %v205, %v200
    %v210 = vunpack.c.l.b16 %v208
    %v211 = vunpack.c.h.b16 %v208
    %v212 = vpack.c.b16 %v210, %v210
    %v213 = vpack.c.b16 %v211, %v211
    %vm216 = vcmask 519168
    %217 = vst.msk [vmem:[#allocation5] sm:$0xf] %vm216, %v212
    %218 = vst.msk [vmem:[#allocation5 + $0x4] sm:$0xf] %vm216, %v213
    // Predicated region
    $region22: #{tpu_custom_call.1} parent=1 // pred_check
      _
    $region23: #{tpu_custom_call.1} parent=1 // pred_check_branch
      %220 = sbr.rel (0) target = $region25
    $region24: #{tpu_custom_call.1} parent=1 // pred_region
      %s222 = ssub.s32 128, 128
      %223 = vsyncadd [#allocation4], %s222
      %s224 = sshll.u32 [#allocation5], 4
      %s225 = int_to_ptr.vmem [resolvable:$true] %s224
      %230 = dma.vmem_to_hbm [thread:$0]  %s225, 128, %s4, [#allocation4], 64, 64, 4
    $region25: #{tpu_custom_call.1} parent=1 // pred_fallthru
      _
    // Predicated region
    $region26: #{tpu_custom_call.1} parent=1 // pred_check
      _
    $region27: #{tpu_custom_call.1} parent=1 // pred_check_branch
      %232 = sbr.rel (0) target = $region29
    $region28: #{tpu_custom_call.1} parent=1 // pred_region
      %233 = dma.done [#allocation4], 128
    $region29: #{tpu_custom_call.1} parent=1 // pred_fallthru
      _
    %234 = vsyncpa [#allocation3], 1
    %235 = vsyncpa [#allocation4], 1

</llo_original>
